<compile_context>
chip_gen: v6e
topology: v6e:2x2x1
jax: 0.10.0
libtpu: 0.0.40
codegen_flags: <defaults>
</compile_context>

<pallas_src>
import functools
import math

import jax
import jax.numpy as jnp
import numpy as np
from jax import lax
from jax.experimental import pallas as pl
from jax.experimental.pallas import tpu as pltpu


def _trans_bottleneck_kernel(H, x_ref, w1_ref, w2_ref, w3_ref, sc_ref, bi_ref,
                             o_ref):
    # x_ref : (M, WC) f32       lane-dense slab, M = N*H rows (batch folded)
    # w1_ref: (WC, WC) bf16     block-diagonal 1x1-conv weight
    # w2_ref: (3*WC, WC) bf16   banded 3x3-conv weight, K-stacked dy taps
    # w3_ref: (3*WC, WC) bf16
    # sc_ref/bi_ref: (3, WC) f32   folded BN scale / bias (channel-tiled)
    # o_ref : (M, WC) f32
    M, WC = x_ref.shape

    x = x_ref[...]                                   # (M, WC) f32 residual

    # Hoist folded-BN rows once.
    sc1, bi1 = sc_ref[0:1, :], bi_ref[0:1, :]
    sc2, bi2 = sc_ref[1:2, :], bi_ref[1:2, :]
    sc3, bi3 = sc_ref[2:3, :], bi_ref[2:3, :]

    # Per-image row index: batch is folded into rows, so the +/-1 row taps
    # must be zeroed at image seams. Computed ONCE, reused by both 3x3 convs.
    row_ids = lax.broadcasted_iota(jnp.int32, (M, WC), 0)
    if H & (H - 1) == 0:                 # static: power-of-two fast path
        row_in_img = row_ids & (H - 1)
    else:
        row_in_img = row_ids % H
    top_mask = row_in_img == 0
    bot_mask = row_in_img == (H - 1)

    # --- conv1 (1x1) as one block-diagonal GEMM, then bn1 + relu ------------
    h = jnp.dot(x.astype(jnp.bfloat16), w1_ref[...],
                preferred_element_type=jnp.float32)
    h = jnp.maximum(h * sc1 + bi1, 0.0)

    def conv3x3(a, w_ref):
        # dy = -1 / 0 / +1 taps; the dx shift and channel mix are folded into
        # the banded (3*WC, WC) weight. Row shifts via XLU roll + per-image
        # boundary masks; all three taps fused into ONE K=3*WC GEMM so the
        # MXU accumulates internally. Single bf16 cast on the fused slab.
        up = jnp.where(top_mask, 0.0, pltpu.roll(a, shift=1, axis=0))     # a[h-1]
        dn = jnp.where(bot_mask, 0.0, pltpu.roll(a, shift=M - 1, axis=0)) # a[h+1]
        a3 = jnp.concatenate([up, a, dn], axis=-1)        # (M, 3*WC), 128-aligned
        return jnp.dot(a3.astype(jnp.bfloat16), w_ref[...],
                       preferred_element_type=jnp.float32)

    # --- conv2 + bn2 + relu --------------------------------------------------
    h = conv3x3(h, w2_ref)
    h = jnp.maximum(h * sc2 + bi2, 0.0)

    # --- conv3 + bn3 ---------------------------------------------------------
    h = conv3x3(h, w3_ref)
    h = h * sc3 + bi3

    # --- residual add + relu, lane-dense unmasked store ----------------------
    o_ref[...] = jnp.maximum(h + x, 0.0).astype(o_ref.dtype)


def trans_bottleneck(x_flat, w1, w2, w3, scales, biases, *, H):
    M, WC = x_flat.shape

    # VMEM guard: the banded-weight specialization is O((W*C)^2); at WC=128 it
    # is ~224 KiB bf16 (fine on all generations), but at WC >= 1024 it would
    # blow the v7x 32/64 MiB VMEM budget.
    w_bytes = (WC * WC + 2 * 3 * WC * WC) * 2
    assert w_bytes < 16 * 1024 * 1024, (
        "banded-weight specialization only for small W*C; "
        "use a K-tiled channels-last GEMM grid for larger layers")
    # TODO(synk): K-tiled channels-last fallback for large-WC PUPNet layers.

    flops = 2 * M * WC * WC + 2 * (2 * M * (3 * WC) * WC)
    bytes_accessed = (2 * M * WC * 4            # x in + out (f32)
                      + w_bytes                 # bf16 weights
                      + 2 * 3 * WC * 4)         # folded BN scale/bias

    kernel = functools.partial(_trans_bottleneck_kernel, H)

    return pl.pallas_call(
        kernel,
        out_shape=jax.ShapeDtypeStruct((M, WC), jnp.float32),
        grid_spec=pltpu.PrefetchScalarGridSpec(
            num_scalar_prefetch=0,
            grid=(1,),                          # single step: batch is in M
            in_specs=[
                pl.BlockSpec((M, WC), lambda i: (0, 0)),
                pl.BlockSpec((WC, WC), lambda i: (0, 0)),
                pl.BlockSpec((3 * WC, WC), lambda i: (0, 0)),
                pl.BlockSpec((3 * WC, WC), lambda i: (0, 0)),
                pl.BlockSpec((3, WC), lambda i: (0, 0)),
                pl.BlockSpec((3, WC), lambda i: (0, 0)),
            ],
            out_specs=pl.BlockSpec((M, WC), lambda i: (0, 0)),
        ),
        compiler_params=pltpu.CompilerParams(
            dimension_semantics=("arbitrary",)),
        cost_estimate=pl.CostEstimate(flops=flops, transcendentals=0,
                                      bytes_accessed=bytes_accessed),
    )(x_flat, w1, w2, w3, scales, biases)


# ---------------------------------------------------------------------------
# Parameter construction (deterministic, mirrors nn.init in __init__)
# ---------------------------------------------------------------------------
def xavier_uniform(key, shape_oikk):
    o, i, kh, kw = shape_oikk
    fan_in, fan_out = i * kh * kw, o * kh * kw
    bound = math.sqrt(6.0 / (fan_in + fan_out))
    return jax.random.uniform(key, shape_oikk, jnp.float32, -bound, bound)


def fold_bn(gamma, beta, mean, var, eps=1e-5):
    scale = gamma / jnp.sqrt(var + eps)
    bias = beta - mean * scale
    return scale, bias


# Lane-dense weight packing: conv weights become GEMM matrices acting on the
# (rows, W*C) activation slab.
def conv1x1_to_blockdiag(w_oi, Wd):
    # (Cout, Cin) torch 1x1 weight -> (Wd*C, Wd*C) block-diagonal matrix
    C = w_oi.shape[0]
    wt = np.asarray(w_oi, np.float32).T            # (Cin, Cout)
    m = np.zeros((Wd * C, Wd * C), np.float32)
    for w in range(Wd):
        m[w * C:(w + 1) * C, w * C:(w + 1) * C] = wt
    return m


def conv3x3_to_band_stacked(w_oikk, Wd):
    # (Cout, Cin, 3, 3) torch weight -> (3*Wd*C, Wd*C) K-stacked banded matrix.
    # Band dy: M[dy*WC + w_in*C+ci, w_out*C+co] = K[dy, dx, ci, co] with
    # dx = w_in - w_out + 1 in {0,1,2} (zero band elsewhere = width padding).
    # dy=0 multiplies the "up" (row h-1) tap, dy=1 the center, dy=2 the "down".
    C = w_oikk.shape[0]
    w_hwio = np.transpose(np.asarray(w_oikk, np.float32), (2, 3, 1, 0))
    WC = Wd * C
    m = np.zeros((3, WC, WC), np.float32)
    for dy in range(3):
        for w_out in range(Wd):
            for dx in range(3):
                w_in = w_out + dx - 1
                if 0 <= w_in < Wd:
                    m[dy, w_in * C:(w_in + 1) * C,
                      w_out * C:(w_out + 1) * C] = w_hwio[dy, dx]
    return m.reshape(3 * WC, WC)


# ---------------------------------------------------------------------------
# Pure-JAX reference (NHWC, same bf16 MXU inputs / f32 accumulation)
# ---------------------------------------------------------------------------
def ref_forward(x, w1_hwio, w2_hwio, w3_hwio, scales_c, biases_c):
    def conv(inp, w, pad):
        return jax.lax.conv_general_dilated(
            inp.astype(jnp.bfloat16), w.astype(jnp.bfloat16), (1, 1), pad,
            dimension_numbers=('NHWC', 'HWIO', 'NHWC'),
            preferred_element_type=jnp.float32)
    h = conv(x, w1_hwio, 'VALID')
    h = jnp.maximum(h * scales_c[0] + biases_c[0], 0.0)
    h = conv(h, w2_hwio, 'SAME')
    h = jnp.maximum(h * scales_c[1] + biases_c[1], 0.0)
    h = conv(h, w3_hwio, 'SAME')
    h = h * scales_c[2] + biases_c[2]
    return jnp.maximum(h + x, 0.0)


if __name__ == "__main__":
    N, C, H, W = 2, 8, 16, 16    # inplanes == planes == 8; W*C = 128 (lanes)
    WC = W * C
    assert WC % 128 == 0

    key = jax.random.PRNGKey(0)
    k1, k2, k3, kx = jax.random.split(key, 4)

    # PyTorch-layout conv weights (Cout, Cin, Kh, Kw), xavier_uniform init.
    w1_t = xavier_uniform(k1, (C, C, 1, 1))
    w2_t = xavier_uniform(k2, (C, C, 3, 3))
    w3_t = xavier_uniform(k3, (C, C, 3, 3))

    # BatchNorm params as initialized: gamma=1, beta=0; eval running stats.
    gamma = jnp.ones((C,), jnp.float32)
    beta = jnp.zeros((C,), jnp.float32)
    mean = jnp.zeros((C,), jnp.float32)
    var = jnp.ones((C,), jnp.float32)
    sc, bi = fold_bn(gamma, beta, mean, var)
    scales_c = jnp.stack([sc, sc, sc])               # (3, C)
    biases_c = jnp.stack([bi, bi, bi])               # (3, C)
    scales = jnp.tile(scales_c, (1, W))              # (3, W*C) lane-tiled
    biases = jnp.tile(biases_c, (1, W))

    # Kernel-layout weights (bf16 for the MXU; accumulation stays f32).
    w1_bd = jnp.asarray(
        conv1x1_to_blockdiag(np.asarray(w1_t)[:, :, 0, 0], W), jnp.bfloat16)
    w2_k = jnp.asarray(conv3x3_to_band_stacked(np.asarray(w2_t), W),
                       jnp.bfloat16)
    w3_k = jnp.asarray(conv3x3_to_band_stacked(np.asarray(w3_t), W),
                       jnp.bfloat16)

    # Activations are kept lane-dense NHWC end-to-end (no NCHW<->NHWC
    # transpose launches around the kernel); the (N,H,W,C)->(N*H, W*C) view
    # is a free, tile-aligned reshape.
    x_nhwc = jax.random.normal(kx, (N, H, W, C), jnp.float32)
    x_flat = x_nhwc.reshape(N * H, WC)

    out_flat = trans_bottleneck(x_flat, w1_bd, w2_k, w3_k, scales, biases, H=H)
    out_flat = jax.block_until_ready(out_flat)
    out_nhwc = out_flat.reshape(N, H, W, C)

    # Reference check.
    w1_hwio = jnp.transpose(w1_t, (2, 3, 1, 0))
    w2_hwio = jnp.transpose(w2_t, (2, 3, 1, 0))
    w3_hwio = jnp.transpose(w3_t, (2, 3, 1, 0))
    ref_nhwc = ref_forward(x_nhwc, w1_hwio, w2_hwio, w3_hwio,
                           scales_c, biases_c)
    np.testing.assert_allclose(np.asarray(out_nhwc), np.asarray(ref_nhwc),
                               rtol=1e-2, atol=1e-2)

    print("KERNEL_OK")
</pallas_src>

<mosaic_0001>
module attributes {stable_mosaic.version = 11 : i64} {
  func.func @_trans_bottleneck_kernel(%arg0: i32, %arg1: memref<32x128xf32, #tpu.memory_space<vmem>>, %arg2: memref<128x128xbf16, #tpu.memory_space<vmem>>, %arg3: memref<384x128xbf16, #tpu.memory_space<vmem>>, %arg4: memref<384x128xbf16, #tpu.memory_space<vmem>>, %arg5: memref<3x128xf32, #tpu.memory_space<vmem>>, %arg6: memref<3x128xf32, #tpu.memory_space<vmem>>, %arg7: memref<32x128xf32, #tpu.memory_space<vmem>>) attributes {dimension_semantics = [#tpu.dimension_semantics<arbitrary>], iteration_bounds = array<i64: 1>, scalar_prefetch = 0 : i64, scratch_operands = 0 : i64, tpu.core_type = #tpu.core_type<tc>, window_params = [{pipeline_mode = #tpu.pipeline_mode<synchronous>, transform_indices = @transform_0, window_bounds = array<i64: 32, 128>}, {pipeline_mode = #tpu.pipeline_mode<synchronous>, transform_indices = @transform_1, window_bounds = array<i64: 128, 128>}, {pipeline_mode = #tpu.pipeline_mode<synchronous>, transform_indices = @transform_2, window_bounds = array<i64: 384, 128>}, {pipeline_mode = #tpu.pipeline_mode<synchronous>, transform_indices = @transform_3, window_bounds = array<i64: 384, 128>}, {pipeline_mode = #tpu.pipeline_mode<synchronous>, transform_indices = @transform_4, window_bounds = array<i64: 3, 128>}, {pipeline_mode = #tpu.pipeline_mode<synchronous>, transform_indices = @transform_5, window_bounds = array<i64: 3, 128>}, {pipeline_mode = #tpu.pipeline_mode<synchronous>, transform_indices = @transform_6, window_bounds = array<i64: 32, 128>}]} {
    %c0 = arith.constant 0 : index
    %c0_0 = arith.constant 0 : index
    %0 = vector.load %arg1[%c0, %c0_0] : memref<32x128xf32, #tpu.memory_space<vmem>>, vector<32x128xf32>
    %c0_1 = arith.constant 0 : index
    %c0_2 = arith.constant 0 : index
    %1 = vector.load %arg5[%c0_1, %c0_2] : memref<3x128xf32, #tpu.memory_space<vmem>>, vector<1x128xf32>
    %c0_3 = arith.constant 0 : index
    %c0_4 = arith.constant 0 : index
    %2 = vector.load %arg6[%c0_3, %c0_4] : memref<3x128xf32, #tpu.memory_space<vmem>>, vector<1x128xf32>
    %c1 = arith.constant 1 : index
    %c0_5 = arith.constant 0 : index
    %3 = vector.load %arg5[%c1, %c0_5] : memref<3x128xf32, #tpu.memory_space<vmem>>, vector<1x128xf32>
    %c1_6 = arith.constant 1 : index
    %c0_7 = arith.constant 0 : index
    %4 = vector.load %arg6[%c1_6, %c0_7] : memref<3x128xf32, #tpu.memory_space<vmem>>, vector<1x128xf32>
    %c2 = arith.constant 2 : index
    %c0_8 = arith.constant 0 : index
    %5 = vector.load %arg5[%c2, %c0_8] : memref<3x128xf32, #tpu.memory_space<vmem>>, vector<1x128xf32>
    %c2_9 = arith.constant 2 : index
    %c0_10 = arith.constant 0 : index
    %6 = vector.load %arg6[%c2_9, %c0_10] : memref<3x128xf32, #tpu.memory_space<vmem>>, vector<1x128xf32>
    %7 = tpu.iota {dimensions = array<i32: 0>} : vector<32x128xi32>
    %c15_i32 = arith.constant 15 : i32
    %8 = vector.broadcast %c15_i32 : i32 to vector<32x128xi32>
    %9 = arith.andi %7, %8 : vector<32x128xi32>
    %c0_i32 = arith.constant 0 : i32
    %10 = vector.broadcast %c0_i32 : i32 to vector<32x128xi32>
    %11 = arith.cmpi eq, %9, %10 : vector<32x128xi32>
    %c15_i32_11 = arith.constant 15 : i32
    %12 = vector.broadcast %c15_i32_11 : i32 to vector<32x128xi32>
    %13 = arith.cmpi eq, %9, %12 : vector<32x128xi32>
    %14 = arith.truncf %0 : vector<32x128xf32> to vector<32x128xbf16>
    %c0_12 = arith.constant 0 : index
    %c0_13 = arith.constant 0 : index
    %15 = vector.load %arg2[%c0_12, %c0_13] : memref<128x128xbf16, #tpu.memory_space<vmem>>, vector<128x128xbf16>
    %cst = arith.constant dense<0.000000e+00> : vector<32x128xf32>
    %16 = tpu.matmul %14, %15, %cst {dimension_numbers = #tpu.dot_dimension_numbers<[1], [0], [0], [1], [0, 0, 1, 1], [], []>} : vector<32x128xbf16>, vector<128x128xbf16>, vector<32x128xf32> -> vector<32x128xf32>
    %17 = vector.broadcast %1 : vector<1x128xf32> to vector<32x128xf32>
    %18 = arith.mulf %16, %17 : vector<32x128xf32>
    %19 = vector.broadcast %2 : vector<1x128xf32> to vector<32x128xf32>
    %20 = arith.addf %18, %19 : vector<32x128xf32>
    %cst_14 = arith.constant 0.000000e+00 : f32
    %21 = vector.broadcast %cst_14 : f32 to vector<32x128xf32>
    %22 = arith.maximumf %20, %21 : vector<32x128xf32>
    %c1_i32 = arith.constant 1 : i32
    %23 = tpu.dynamic_rotate %22 by %c1_i32 dim 0 : vector<32x128xf32>, i32 -> vector<32x128xf32>
    %cst_15 = arith.constant 0.000000e+00 : f32
    %24 = vector.broadcast %cst_15 : f32 to vector<32x128xf32>
    %25 = arith.select %11, %24, %23 : vector<32x128xi1>, vector<32x128xf32>
    %c31_i32 = arith.constant 31 : i32
    %26 = tpu.dynamic_rotate %22 by %c31_i32 dim 0 : vector<32x128xf32>, i32 -> vector<32x128xf32>
    %cst_16 = arith.constant 0.000000e+00 : f32
    %27 = vector.broadcast %cst_16 : f32 to vector<32x128xf32>
    %28 = arith.select %13, %27, %26 : vector<32x128xi1>, vector<32x128xf32>
    %29 = tpu.concatenate %25, %22, %28 in 1 : vector<32x128xf32>, vector<32x128xf32>, vector<32x128xf32> -> vector<32x384xf32>
    %30 = arith.truncf %29 : vector<32x384xf32> to vector<32x384xbf16>
    %c0_17 = arith.constant 0 : index
    %c0_18 = arith.constant 0 : index
    %31 = vector.load %arg3[%c0_17, %c0_18] : memref<384x128xbf16, #tpu.memory_space<vmem>>, vector<384x128xbf16>
    %cst_19 = arith.constant dense<0.000000e+00> : vector<32x128xf32>
    %32 = tpu.matmul %30, %31, %cst_19 {dimension_numbers = #tpu.dot_dimension_numbers<[1], [0], [0], [1], [0, 0, 1, 1], [], []>} : vector<32x384xbf16>, vector<384x128xbf16>, vector<32x128xf32> -> vector<32x128xf32>
    %33 = vector.broadcast %3 : vector<1x128xf32> to vector<32x128xf32>
    %34 = arith.mulf %32, %33 : vector<32x128xf32>
    %35 = vector.broadcast %4 : vector<1x128xf32> to vector<32x128xf32>
    %36 = arith.addf %34, %35 : vector<32x128xf32>
    %cst_20 = arith.constant 0.000000e+00 : f32
    %37 = vector.broadcast %cst_20 : f32 to vector<32x128xf32>
    %38 = arith.maximumf %36, %37 : vector<32x128xf32>
    %c1_i32_21 = arith.constant 1 : i32
    %39 = tpu.dynamic_rotate %38 by %c1_i32_21 dim 0 : vector<32x128xf32>, i32 -> vector<32x128xf32>
    %cst_22 = arith.constant 0.000000e+00 : f32
    %40 = vector.broadcast %cst_22 : f32 to vector<32x128xf32>
    %41 = arith.select %11, %40, %39 : vector<32x128xi1>, vector<32x128xf32>
    %c31_i32_23 = arith.constant 31 : i32
    %42 = tpu.dynamic_rotate %38 by %c31_i32_23 dim 0 : vector<32x128xf32>, i32 -> vector<32x128xf32>
    %cst_24 = arith.constant 0.000000e+00 : f32
    %43 = vector.broadcast %cst_24 : f32 to vector<32x128xf32>
    %44 = arith.select %13, %43, %42 : vector<32x128xi1>, vector<32x128xf32>
    %45 = tpu.concatenate %41, %38, %44 in 1 : vector<32x128xf32>, vector<32x128xf32>, vector<32x128xf32> -> vector<32x384xf32>
    %46 = arith.truncf %45 : vector<32x384xf32> to vector<32x384xbf16>
    %c0_25 = arith.constant 0 : index
    %c0_26 = arith.constant 0 : index
    %47 = vector.load %arg4[%c0_25, %c0_26] : memref<384x128xbf16, #tpu.memory_space<vmem>>, vector<384x128xbf16>
    %cst_27 = arith.constant dense<0.000000e+00> : vector<32x128xf32>
    %48 = tpu.matmul %46, %47, %cst_27 {dimension_numbers = #tpu.dot_dimension_numbers<[1], [0], [0], [1], [0, 0, 1, 1], [], []>} : vector<32x384xbf16>, vector<384x128xbf16>, vector<32x128xf32> -> vector<32x128xf32>
    %49 = vector.broadcast %5 : vector<1x128xf32> to vector<32x128xf32>
    %50 = arith.mulf %48, %49 : vector<32x128xf32>
    %51 = vector.broadcast %6 : vector<1x128xf32> to vector<32x128xf32>
    %52 = arith.addf %50, %51 : vector<32x128xf32>
    %53 = arith.addf %52, %0 : vector<32x128xf32>
    %cst_28 = arith.constant 0.000000e+00 : f32
    %54 = vector.broadcast %cst_28 : f32 to vector<32x128xf32>
    %55 = arith.maximumf %53, %54 : vector<32x128xf32>
    %c0_29 = arith.constant 0 : index
    %c0_30 = arith.constant 0 : index
    %56 = vector.load %arg7[%c0_29, %c0_30] : memref<32x128xf32, #tpu.memory_space<vmem>>, vector<32x128xf32>
    tpu.vector_store %arg7[%c0_29, %c0_30], %55 {strides = array<i32>} : memref<32x128xf32, #tpu.memory_space<vmem>>, vector<32x128xf32>,
    return
  }
  func.func @transform_0(%arg0: i32) -> (i32, i32) {
    %c0_i32 = arith.constant 0 : i32
    %c0_i32_0 = arith.constant 0 : i32
    %c0_i32_1 = arith.constant 0 : i32
    return %c0_i32, %c0_i32_0 : i32, i32
  }
  func.func @transform_1(%arg0: i32) -> (i32, i32) {
    %c0_i32 = arith.constant 0 : i32
    %c0_i32_0 = arith.constant 0 : i32
    %c0_i32_1 = arith.constant 0 : i32
    return %c0_i32, %c0_i32_0 : i32, i32
  }
  func.func @transform_2(%arg0: i32) -> (i32, i32) {
    %c0_i32 = arith.constant 0 : i32
    %c0_i32_0 = arith.constant 0 : i32
    %c0_i32_1 = arith.constant 0 : i32
    return %c0_i32, %c0_i32_0 : i32, i32
  }
  func.func @transform_3(%arg0: i32) -> (i32, i32) {
    %c0_i32 = arith.constant 0 : i32
    %c0_i32_0 = arith.constant 0 : i32
    %c0_i32_1 = arith.constant 0 : i32
    return %c0_i32, %c0_i32_0 : i32, i32
  }
  func.func @transform_4(%arg0: i32) -> (i32, i32) {
    %c0_i32 = arith.constant 0 : i32
    %c0_i32_0 = arith.constant 0 : i32
    %c0_i32_1 = arith.constant 0 : i32
    return %c0_i32, %c0_i32_0 : i32, i32
  }
  func.func @transform_5(%arg0: i32) -> (i32, i32) {
    %c0_i32 = arith.constant 0 : i32
    %c0_i32_0 = arith.constant 0 : i32
    %c0_i32_1 = arith.constant 0 : i32
    return %c0_i32, %c0_i32_0 : i32, i32
  }
  func.func @transform_6(%arg0: i32) -> (i32, i32) {
    %c0_i32 = arith.constant 0 : i32
    %c0_i32_0 = arith.constant 0 : i32
    %c0_i32_1 = arith.constant 0 : i32
    return %c0_i32, %c0_i32_0 : i32, i32
  }
}

</mosaic_0001>

<llo_original>
// kernel: tpu_custom_call.1
$region0: #{tpu_custom_call.1}
  #allocation0 [shape = 'u32[]', space=smem, size = 0x4, offset = 0x4, fixed_abs, tag = 'smem constant byte address 0x4 - core index']
  #allocation1 [shape = 'u32[144,128]{1,0:T(1,128)}', space=vmem, size = 0x12000, scoped, tag = 'internal scratch']
  %s0 = inlined_call_operand.hbm [shape: f32[32,128], index: 0, kind: input, shape index: {}]
  %s1 = inlined_call_operand.hbm [shape: bf16[128,128], index: 1, kind: input, shape index: {}]
  %s2 = inlined_call_operand.hbm [shape: bf16[384,128], index: 2, kind: input, shape index: {}]
  %s3 = inlined_call_operand.hbm [shape: bf16[384,128], index: 3, kind: input, shape index: {}]
  %s4 = inlined_call_operand.vmem [shape: f32[3,128], index: 4, kind: input, shape index: {}]
  %s5 = inlined_call_operand.vmem [shape: f32[3,128], index: 5, kind: input, shape index: {}]
  %s6 = inlined_call_operand.hbm [shape: f32[32,128], index: 6, kind: output, shape index: {}]
  %s7 = sld [smem:[#allocation0]]
  $region50: #{tpu_custom_call.1} parent=0
    _
  %s9 = ssub.s32 1, %s7
  %s10 = scalar_select 0, %s9, %s7
  $region1: #{tpu_custom_call.1} parent=0
    #allocation2 [shape = 'u8[16384]{0}', space=vmem, size = 0x4000, scoped, tag = 'input window, operand 0, single buffered']
    #allocation3 [shape = 's32[1]{0}', space=sflag, size = 0x4, scoped, tag = 'scoped memory for tpu_custom_call.1']
    #allocation4 [shape = 's32[1]{0}', space=sflag, size = 0x4, scoped, tag = 'scoped memory for tpu_custom_call.1']
    #allocation5 [shape = 'u8[32768]{0}', space=vmem, size = 0x8000, scoped, tag = 'input window, operand 1, single buffered']
    #allocation6 [shape = 's32[1]{0}', space=sflag, size = 0x4, scoped, tag = 'scoped memory for tpu_custom_call.1']
    #allocation7 [shape = 'u8[98304]{0}', space=vmem, size = 0x18000, scoped, tag = 'input window, operand 2, single buffered']
    #allocation8 [shape = 'u8[98304]{0}', space=vmem, size = 0x18000, scoped, tag = 'input window, operand 3, single buffered']
    #allocation9 [shape = 's32[1]{0}', space=sflag, size = 0x4, scoped, tag = 'scoped memory for tpu_custom_call.1']
    #allocation10 [shape = 'u8[16384]{0}', space=vmem, size = 0x4000, scoped, tag = 'output window, operand 0, single buffered']
    %11 = vsyncpa [#allocation3], 0
    %12 = vsyncpa [#allocation6], 0
    %13 = vsyncpa [#allocation9], 0
    %14 = vsyncpa [#allocation4], 0
    // Predicated region
    $region2: #{tpu_custom_call.1} parent=1 // pred_check
      _
    $region3: #{tpu_custom_call.1} parent=1 // pred_check_branch
      %16 = sbr.rel (0) target = $region5
    $region4: #{tpu_custom_call.1} parent=1 // pred_region
      %s18 = ssub.s32 512, 512
      %19 = vsyncadd [#allocation3], %s18
      %s20 = sshll.u32 [#allocation2], 4
      %s21 = int_to_ptr.vmem [resolvable:$true] %s20
      %26 = dma.hbm_to_vmem [thread:$0]  %s0, 512, %s21, [#allocation3], 128, 128, 8
    $region5: #{tpu_custom_call.1} parent=1 // pred_fallthru
      _
    // Predicated region
    $region6: #{tpu_custom_call.1} parent=1 // pred_check
      _
    $region7: #{tpu_custom_call.1} parent=1 // pred_check_branch
      %28 = sbr.rel (0) target = $region9
    $region8: #{tpu_custom_call.1} parent=1 // pred_region
      %s30 = ssub.s32 1024, 1024
      %31 = vsyncadd [#allocation6], %s30
      %s32 = sshll.u32 [#allocation5], 4
      %s33 = int_to_ptr.vmem [resolvable:$true] %s32
      %38 = dma.hbm_to_vmem [thread:$0]  %s1, 1024, %s33, [#allocation6], 64, 64, 4
    $region9: #{tpu_custom_call.1} parent=1 // pred_fallthru
      _
    // Predicated region
    $region10: #{tpu_custom_call.1} parent=1 // pred_check
      _
    $region11: #{tpu_custom_call.1} parent=1 // pred_check_branch
      %40 = sbr.rel (0) target = $region13
    $region12: #{tpu_custom_call.1} parent=1 // pred_region
      %s42 = ssub.s32 3072, 3072
      %43 = vsyncadd [#allocation6], %s42
      %s44 = sshll.u32 [#allocation7], 4
      %s45 = int_to_ptr.vmem [resolvable:$true] %s44
      %50 = dma.hbm_to_vmem [thread:$0]  %s2, 3072, %s45, [#allocation6], 64, 64, 4
    $region13: #{tpu_custom_call.1} parent=1 // pred_fallthru
      _
    // Predicated region
    $region14: #{tpu_custom_call.1} parent=1 // pred_check
      _
    $region15: #{tpu_custom_call.1} parent=1 // pred_check_branch
      %52 = sbr.rel (0) target = $region17
    $region16: #{tpu_custom_call.1} parent=1 // pred_region
      %s54 = ssub.s32 3072, 3072
      %55 = vsyncadd [#allocation9], %s54
      %s56 = sshll.u32 [#allocation8], 4
      %s57 = int_to_ptr.vmem [resolvable:$true] %s56
      %62 = dma.hbm_to_vmem [thread:$0]  %s3, 3072, %s57, [#allocation9], 64, 64, 4
    $region17: #{tpu_custom_call.1} parent=1 // pred_fallthru
      _
    // Predicated region
    $region18: #{tpu_custom_call.1} parent=1 // pred_check
      _
    $region19: #{tpu_custom_call.1} parent=1 // pred_check_branch
      %64 = sbr.rel (0) target = $region21
    $region20: #{tpu_custom_call.1} parent=1 // pred_region
      _
    $region21: #{tpu_custom_call.1} parent=1 // pred_fallthru
      _
    // Predicated region
    $region22: #{tpu_custom_call.1} parent=1 // pred_check
      _
    $region23: #{tpu_custom_call.1} parent=1 // pred_check_branch
      %66 = sbr.rel (0) target = $region25
    $region24: #{tpu_custom_call.1} parent=1 // pred_region
      _
    $region25: #{tpu_custom_call.1} parent=1 // pred_fallthru
      _
    // Predicated region
    $region26: #{tpu_custom_call.1} parent=1 // pred_check
      _
    $region27: #{tpu_custom_call.1} parent=1 // pred_check_branch
      %68 = sbr.rel (0) target = $region29
    $region28: #{tpu_custom_call.1} parent=1 // pred_region
      %69 = dma.done [#allocation3], 512
    $region29: #{tpu_custom_call.1} parent=1 // pred_fallthru
      _
    // Predicated region
    $region30: #{tpu_custom_call.1} parent=1 // pred_check
      _
    $region31: #{tpu_custom_call.1} parent=1 // pred_check_branch
      %71 = sbr.rel (0) target = $region33
    $region32: #{tpu_custom_call.1} parent=1 // pred_region
      %72 = dma.done [#allocation6], 1024
    $region33: #{tpu_custom_call.1} parent=1 // pred_fallthru
      _
    // Predicated region
    $region34: #{tpu_custom_call.1} parent=1 // pred_check
      _
    $region35: #{tpu_custom_call.1} parent=1 // pred_check_branch
      %74 = sbr.rel (0) target = $region37
    $region36: #{tpu_custom_call.1} parent=1 // pred_region
      %75 = dma.done [#allocation6], 3072
    $region37: #{tpu_custom_call.1} parent=1 // pred_fallthru
      _
    // Predicated region
    $region38: #{tpu_custom_call.1} parent=1 // pred_check
      _
    $region39: #{tpu_custom_call.1} parent=1 // pred_check_branch
      %77 = sbr.rel (0) target = $region41
    $region40: #{tpu_custom_call.1} parent=1 // pred_region
      %78 = dma.done [#allocation9], 3072
    $region41: #{tpu_custom_call.1} parent=1 // pred_fallthru
      _
    %v80 = vld [vmem:[#allocation2] sm:$0xff]
    %v81 = vld [vmem:[#allocation2 + $0x8] sm:$0xff]
    %v82 = vld [vmem:[#allocation2 + $0x10] sm:$0xff]
    %v83 = vld [vmem:[#allocation2 + $0x18] sm:$0xff]
    %v84 = vld [vmem:[%s4] sm:$0x1]
    %v85 = vld [vmem:[%s5] sm:$0x1]
    %v86 = vld [vmem:[%s4 + $0x1] sm:$0x1]
    %v87 = vld [vmem:[%s5 + $0x1] sm:$0x1]
    %v88 = vld [vmem:[%s4 + $0x2] sm:$0x1]
    %v89 = vld [vmem:[%s5 + $0x2] sm:$0x1]
    %v90 = vlaneseq
    %v91 = vshrl.u32 %v90, 7
    %v92 = vadd.s32 %v91, 8
    %v93 = vadd.s32 %v91, 16
    %v94 = vadd.s32 %v91, 24
    %v95 = vand.u32 %v91, 15
    %v96 = vand.u32 %v92, 15
    %v97 = vand.u32 %v93, 15
    %v98 = vand.u32 %v94, 15
    %vm99 = vcmp.eq.s32.totalorder %v95, 0
    %vm100 = vcmp.eq.s32.totalorder %v96, 0
    %vm101 = vcmp.eq.s32.totalorder %v97, 0
    %vm102 = vcmp.eq.s32.totalorder %v98, 0
    %vm103 = vcmp.eq.s32.totalorder %v95, 15
    %vm104 = vcmp.eq.s32.totalorder %v96, 15
    %vm105 = vcmp.eq.s32.totalorder %v97, 15
    %vm106 = vcmp.eq.s32.totalorder %v98, 15
    %v107 = vpack.c.bf16 %v81, %v80
    %v108 = vpack.c.bf16 %v83, %v82
    %v109 = vld [vmem:[#allocation5] sm:$0xf]
    %v110 = vld [vmem:[#allocation5 + $0x4] sm:$0xf]
    %v111 = vld [vmem:[#allocation5 + $0x8] sm:$0xf]
    %v112 = vld [vmem:[#allocation5 + $0xc] sm:$0xf]
    %v113 = vld [vmem:[#allocation5 + $0x10] sm:$0xf]
    %v114 = vld [vmem:[#allocation5 + $0x14] sm:$0xf]
    %v115 = vld [vmem:[#allocation5 + $0x18] sm:$0xf]
    %v116 = vld [vmem:[#allocation5 + $0x1c] sm:$0xf]
    %v117 = vld [vmem:[#allocation5 + $0x20] sm:$0xf]
    %v118 = vld [vmem:[#allocation5 + $0x24] sm:$0xf]
    %v119 = vld [vmem:[#allocation5 + $0x28] sm:$0xf]
    %v120 = vld [vmem:[#allocation5 + $0x2c] sm:$0xf]
    %v121 = vld [vmem:[#allocation5 + $0x30] sm:$0xf]
    %v122 = vld [vmem:[#allocation5 + $0x34] sm:$0xf]
    %v123 = vld [vmem:[#allocation5 + $0x38] sm:$0xf]
    %v124 = vld [vmem:[#allocation5 + $0x3c] sm:$0xf]
    %v141 = vunpack.c.l.b16 %v109
    %v142 = vunpack.c.l.b16 %v110
    %v143 = vunpack.c.l.b16 %v111
    %v144 = vunpack.c.l.b16 %v112
    %v145 = vunpack.c.l.b16 %v113
    %v146 = vunpack.c.l.b16 %v114
    %v147 = vunpack.c.l.b16 %v115
    %v148 = vunpack.c.l.b16 %v116
    %v149 = vunpack.c.l.b16 %v117
    %v150 = vunpack.c.l.b16 %v118
    %v151 = vunpack.c.l.b16 %v119
    %v152 = vunpack.c.l.b16 %v120
    %v153 = vunpack.c.l.b16 %v121
    %v154 = vunpack.c.l.b16 %v122
    %v155 = vunpack.c.l.b16 %v123
    %v156 = vunpack.c.l.b16 %v124
    %v157 = vpack.c.b16 %v142, %v141
    %v158 = vpack.c.b16 %v144, %v143
    %v159 = vpack.c.b16 %v146, %v145
    %v160 = vpack.c.b16 %v148, %v147
    %v161 = vpack.c.b16 %v150, %v149
    %v162 = vpack.c.b16 %v152, %v151
    %v163 = vpack.c.b16 %v154, %v153
    %v164 = vpack.c.b16 %v156, %v155
    %173 = vmatprep.subr.bf16.mxu0 0
    %174 = vmatpush1.bf16.msra.mxu0 %v164
    %175 = vmatprep.subr.bf16.mxu0 0
    %176 = vmatpush1.bf16.msra.mxu0 %v163
    %177 = vmatprep.subr.bf16.mxu0 0
    %178 = vmatpush1.bf16.msra.mxu0 %v162
    %179 = vmatprep.subr.bf16.mxu0 0
    %180 = vmatpush1.bf16.msra.mxu0 %v161
    %181 = vmatprep.subr.bf16.mxu0 0
    %182 = vmatpush1.bf16.msra.mxu0 %v160
    %183 = vmatprep.subr.bf16.mxu0 0
    %184 = vmatpush1.bf16.msra.mxu0 %v159
    %185 = vmatprep.subr.bf16.mxu0 0
    %186 = vmatpush1.bf16.msra.mxu0 %v158
    %187 = vmatprep.subr.bf16.mxu0 0
    %188 = vmatpush1.bf16.msra.mxu0 %v157
    %189 = vmatprep.subr.bf16.mxu0 0
    %190 = vmatpush2.bf16.msra.mxu0 0
    %191 = vmatprep.subr.bf16.mxu0 0
    %192 = vmatpush2.bf16.msra.mxu0 0
    %193 = vmatprep.subr.bf16.mxu0 0
    %194 = vmatpush2.bf16.msra.mxu0 0
    %195 = vmatprep.subr.bf16.mxu0 0
    %196 = vmatpush2.bf16.msra.mxu0 0
    %197 = vmatprep.subr.bf16.mxu0 0
    %198 = vmatpush2.bf16.msra.mxu0 0
    %199 = vmatprep.subr.bf16.mxu0 0
    %200 = vmatpush2.bf16.msra.mxu0 0
    %201 = vmatprep.subr.bf16.mxu0 0
    %202 = vmatpush2.bf16.msra.mxu0 0
    %203 = vmatprep.subr.bf16.mxu0 0
    %204 = vmatpush2.bf16.msra.mxu0 0
    %205 = vmatprep.mubr.bf16.mxu0 0
    %206 = vmatmul.mubr.bf16.gmra.mxu0 %v107
    %v207 = vpop.f32.mrf.mxu0
    %v208 = vadd.f32 0.0, %v207
    %v209 = vpop.f32.mrf.mxu0
    %v210 = vpop.f32.mrf.mxu0
    %v211 = vadd.f32 0.0, %v210
    %v212 = vpop.f32.mrf.mxu0
    %213 = vmatprep.mubr.bf16.mxu0 0
    %214 = vmatmul.mubr.bf16.gmra.mxu0 %v108
    %v215 = vpop.f32.mrf.mxu0
    %v216 = vadd.f32 0.0, %v215
    %v217 = vpop.f32.mrf.mxu0
    %v218 = vpop.f32.mrf.mxu0
    %v219 = vadd.f32 0.0, %v218
    %v220 = vpop.f32.mrf.mxu0
    %221 = vdwg.mxu0
    %v222 = vlaneseq
    %v223 = vshrl.u32 %v222, 7
    %v224 = vsub.s32 0, %v223
    %v225 = vrot.slane %v84, %v224
    %v226 = vmul.f32 %v208, %v225
    %v227 = vmul.f32 %v211, %v225
    %v228 = vmul.f32 %v216, %v225
    %v229 = vmul.f32 %v219, %v225
    %v230 = vlaneseq
    %v231 = vshrl.u32 %v230, 7
    %v232 = vsub.s32 0, %v231
    %v233 = vrot.slane %v85, %v232
    %v234 = vadd.f32 %v226, %v233
    %v235 = vadd.f32 %v227, %v233
    %v236 = vadd.f32 %v228, %v233
    %v237 = vadd.f32 %v229, %v233
    %v238 = vmax.f32 %v234, 0.0
    %v239 = vmax.f32 %v235, 0.0
    %v240 = vmax.f32 %v236, 0.0
    %v241 = vmax.f32 %v237, 0.0
    %v242 = vrot.slane %v238, 7
    %v243 = vrot.slane %v239, 7
    %v244 = vrot.slane %v240, 7
    %v245 = vrot.slane %v241, 7
    %vm246 = vcmp.lt.s32.totalorder %v91, 1
    %v247 = vsel %vm246, %v244, %v245
    %v248 = vsel %vm246, %v243, %v244
    %v249 = vsel %vm246, %v242, %v243
    %v250 = vsel %vm246, %v245, %v242
    %v251 = vsel %vm99, 0.0, %v250
    %v252 = vsel %vm100, 0.0, %v249
    %v253 = vsel %vm101, 0.0, %v248
    %v254 = vsel %vm102, 0.0, %v247
    %v255 = vrot.slane %v238, 1
    %v256 = vrot.slane %v239, 1
    %v257 = vrot.slane %v240, 1
    %v258 = vrot.slane %v241, 1
    %vm259 = vcmp.lt.s32.totalorder %v91, 7
    %v260 = vsel %vm259, %v257, %v258
    %v261 = vsel %vm259, %v256, %v257
    %v262 = vsel %vm259, %v255, %v256
    %v263 = vsel %vm259, %v258, %v255
    %v264 = vsel %vm103, 0.0, %v262
    %v265 = vsel %vm104, 0.0, %v261
    %v266 = vsel %vm105, 0.0, %v260
    %v267 = vsel %vm106, 0.0, %v263
    %v268 = vpack.c.bf16 %v252, %v251
    %v269 = vpack.c.bf16 %v239, %v238
    %v270 = vpack.c.bf16 %v265, %v264
    %v271 = vpack.c.bf16 %v254, %v253
    %v272 = vpack.c.bf16 %v241, %v240
    %v273 = vpack.c.bf16 %v267, %v266
    %v274 = vld [vmem:[#allocation7] sm:$0xf]
    %v275 = vld [vmem:[#allocation7 + $0x4] sm:$0xf]
    %v276 = vld [vmem:[#allocation7 + $0x8] sm:$0xf]
    %v277 = vld [vmem:[#allocation7 + $0xc] sm:$0xf]
    %v278 = vld [vmem:[#allocation7 + $0x10] sm:$0xf]
    %v279 = vld [vmem:[#allocation7 + $0x14] sm:$0xf]
    %v280 = vld [vmem:[#allocation7 + $0x18] sm:$0xf]
    %v281 = vld [vmem:[#allocation7 + $0x1c] sm:$0xf]
    %v282 = vld [vmem:[#allocation7 + $0x20] sm:$0xf]
    %v283 = vld [vmem:[#allocation7 + $0x24] sm:$0xf]
    %v284 = vld [vmem:[#allocation7 + $0x28] sm:$0xf]
    %v285 = vld [vmem:[#allocation7 + $0x2c] sm:$0xf]
    %v286 = vld [vmem:[#allocation7 + $0x30] sm:$0xf]
    %v287 = vld [vmem:[#allocation7 + $0x34] sm:$0xf]
    %v288 = vld [vmem:[#allocation7 + $0x38] sm:$0xf]
    %v289 = vld [vmem:[#allocation7 + $0x3c] sm:$0xf]
    %v290 = vld [vmem:[#allocation7 + $0x40] sm:$0xf]
    %v291 = vld [vmem:[#allocation7 + $0x44] sm:$0xf]
    %v292 = vld [vmem:[#allocation7 + $0x48] sm:$0xf]
    %v293 = vld [vmem:[#allocation7 + $0x4c] sm:$0xf]
    %v294 = vld [vmem:[#allocation7 + $0x50] sm:$0xf]
    %v295 = vld [vmem:[#allocation7 + $0x54] sm:$0xf]
    %v296 = vld [vmem:[#allocation7 + $0x58] sm:$0xf]
    %v297 = vld [vmem:[#allocation7 + $0x5c] sm:$0xf]
    %v298 = vld [vmem:[#allocation7 + $0x60] sm:$0xf]
    %v299 = vld [vmem:[#allocation7 + $0x64] sm:$0xf]
    %v300 = vld [vmem:[#allocation7 + $0x68] sm:$0xf]
    %v301 = vld [vmem:[#allocation7 + $0x6c] sm:$0xf]
    %v302 = vld [vmem:[#allocation7 + $0x70] sm:$0xf]
    %v303 = vld [vmem:[#allocation7 + $0x74] sm:$0xf]
    %v304 = vld [vmem:[#allocation7 + $0x78] sm:$0xf]
    %v305 = vld [vmem:[#allocation7 + $0x7c] sm:$0xf]
    %v306 = vld [vmem:[#allocation7 + $0x80] sm:$0xf]
    %v307 = vld [vmem:[#allocation7 + $0x84] sm:$0xf]
    %v308 = vld [vmem:[#allocation7 + $0x88] sm:$0xf]
    %v309 = vld [vmem:[#allocation7 + $0x8c] sm:$0xf]
    %v310 = vld [vmem:[#allocation7 + $0x90] sm:$0xf]
    %v311 = vld [vmem:[#allocation7 + $0x94] sm:$0xf]
    %v312 = vld [vmem:[#allocation7 + $0x98] sm:$0xf]
    %v313 = vld [vmem:[#allocation7 + $0x9c] sm:$0xf]
    %v314 = vld [vmem:[#allocation7 + $0xa0] sm:$0xf]
    %v315 = vld [vmem:[#allocation7 + $0xa4] sm:$0xf]
    %v316 = vld [vmem:[#allocation7 + $0xa8] sm:$0xf]
    %v317 = vld [vmem:[#allocation7 + $0xac] sm:$0xf]
    %v318 = vld [vmem:[#allocation7 + $0xb0] sm:$0xf]
    %v319 = vld [vmem:[#allocation7 + $0xb4] sm:$0xf]
    %v320 = vld [vmem:[#allocation7 + $0xb8] sm:$0xf]
    %v321 = vld [vmem:[#allocation7 + $0xbc] sm:$0xf]
    %v370 = vunpack.c.l.b16 %v274
    %v371 = vunpack.c.l.b16 %v275
    %v372 = vunpack.c.l.b16 %v276
    %v373 = vunpack.c.l.b16 %v277
    %v374 = vunpack.c.l.b16 %v278
    %v375 = vunpack.c.l.b16 %v279
    %v376 = vunpack.c.l.b16 %v280
    %v377 = vunpack.c.l.b16 %v281
    %v378 = vunpack.c.l.b16 %v282
    %v379 = vunpack.c.l.b16 %v283
    %v380 = vunpack.c.l.b16 %v284
    %v381 = vunpack.c.l.b16 %v285
    %v382 = vunpack.c.l.b16 %v286
    %v383 = vunpack.c.l.b16 %v287
    %v384 = vunpack.c.l.b16 %v288
    %v385 = vunpack.c.l.b16 %v289
    %v386 = vunpack.c.l.b16 %v290
    %v387 = vunpack.c.l.b16 %v291
    %v388 = vunpack.c.l.b16 %v292
    %v389 = vunpack.c.l.b16 %v293
    %v390 = vunpack.c.l.b16 %v294
    %v391 = vunpack.c.l.b16 %v295
    %v392 = vunpack.c.l.b16 %v296
    %v393 = vunpack.c.l.b16 %v297
    %v394 = vunpack.c.l.b16 %v298
    %v395 = vunpack.c.l.b16 %v299
    %v396 = vunpack.c.l.b16 %v300
    %v397 = vunpack.c.l.b16 %v301
    %v398 = vunpack.c.l.b16 %v302
    %v399 = vunpack.c.l.b16 %v303
    %v400 = vunpack.c.l.b16 %v304
    %v401 = vunpack.c.l.b16 %v305
    %v402 = vunpack.c.l.b16 %v306
    %v403 = vunpack.c.l.b16 %v307
    %v404 = vunpack.c.l.b16 %v308
    %v405 = vunpack.c.l.b16 %v309
    %v406 = vunpack.c.l.b16 %v310
    %v407 = vunpack.c.l.b16 %v311
    %v408 = vunpack.c.l.b16 %v312
    %v409 = vunpack.c.l.b16 %v313
    %v410 = vunpack.c.l.b16 %v314
    %v411 = vunpack.c.l.b16 %v315
    %v412 = vunpack.c.l.b16 %v316
    %v413 = vunpack.c.l.b16 %v317
    %v414 = vunpack.c.l.b16 %v318
    %v415 = vunpack.c.l.b16 %v319
    %v416 = vunpack.c.l.b16 %v320
    %v417 = vunpack.c.l.b16 %v321
    %v418 = vpack.c.b16 %v371, %v370
    %v419 = vpack.c.b16 %v373, %v372
    %v420 = vpack.c.b16 %v375, %v374
    %v421 = vpack.c.b16 %v377, %v376
    %v422 = vpack.c.b16 %v379, %v378
    %v423 = vpack.c.b16 %v381, %v380
    %v424 = vpack.c.b16 %v383, %v382
    %v425 = vpack.c.b16 %v385, %v384
    %v426 = vpack.c.b16 %v387, %v386
    %v427 = vpack.c.b16 %v389, %v388
    %v428 = vpack.c.b16 %v391, %v390
    %v429 = vpack.c.b16 %v393, %v392
    %v430 = vpack.c.b16 %v395, %v394
    %v431 = vpack.c.b16 %v397, %v396
    %v432 = vpack.c.b16 %v399, %v398
    %v433 = vpack.c.b16 %v401, %v400
    %v434 = vpack.c.b16 %v403, %v402
    %v435 = vpack.c.b16 %v405, %v404
    %v436 = vpack.c.b16 %v407, %v406
    %v437 = vpack.c.b16 %v409, %v408
    %v438 = vpack.c.b16 %v411, %v410
    %v439 = vpack.c.b16 %v413, %v412
    %v440 = vpack.c.b16 %v415, %v414
    %v441 = vpack.c.b16 %v417, %v416
    %466 = vmatprep.subr.bf16.mxu0 0
    %467 = vmatpush1.bf16.msra.mxu0 %v425
    %468 = vmatprep.subr.bf16.mxu0 0
    %469 = vmatpush1.bf16.msra.mxu0 %v424
    %470 = vmatprep.subr.bf16.mxu0 0
    %471 = vmatpush1.bf16.msra.mxu0 %v423
    %472 = vmatprep.subr.bf16.mxu0 0
    %473 = vmatpush1.bf16.msra.mxu0 %v422
    %474 = vmatprep.subr.bf16.mxu0 0
    %475 = vmatpush1.bf16.msra.mxu0 %v421
    %476 = vmatprep.subr.bf16.mxu0 0
    %477 = vmatpush1.bf16.msra.mxu0 %v420
    %478 = vmatprep.subr.bf16.mxu0 0
    %479 = vmatpush1.bf16.msra.mxu0 %v419
    %480 = vmatprep.subr.bf16.mxu0 0
    %481 = vmatpush1.bf16.msra.mxu0 %v418
    %482 = vmatprep.subr.bf16.mxu0 0
    %483 = vmatpush2.bf16.msra.mxu0 %v433
    %484 = vmatprep.subr.bf16.mxu0 0
    %485 = vmatpush2.bf16.msra.mxu0 %v432
    %486 = vmatprep.subr.bf16.mxu0 0
    %487 = vmatpush2.bf16.msra.mxu0 %v431
    %488 = vmatprep.subr.bf16.mxu0 0
    %489 = vmatpush2.bf16.msra.mxu0 %v430
    %490 = vmatprep.subr.bf16.mxu0 0
    %491 = vmatpush2.bf16.msra.mxu0 %v429
    %492 = vmatprep.subr.bf16.mxu0 0
    %493 = vmatpush2.bf16.msra.mxu0 %v428
    %494 = vmatprep.subr.bf16.mxu0 0
    %495 = vmatpush2.bf16.msra.mxu0 %v427
    %496 = vmatprep.subr.bf16.mxu0 0
    %497 = vmatpush2.bf16.msra.mxu0 %v426
    %498 = vmatprep.mubr.bf16.mxu0 %v269
    %499 = vmatmul.mubr.bf16.gmra.mxu0 %v268
    %v500 = vpop.f32.mrf.mxu0
    %v501 = vadd.f32 0.0, %v500
    %v502 = vpop.f32.mrf.mxu0
    %v503 = vpop.f32.mrf.mxu0
    %v504 = vadd.f32 0.0, %v503
    %v505 = vpop.f32.mrf.mxu0
    %506 = vmatprep.mubr.bf16.mxu0 %v272
    %507 = vmatmul.mubr.bf16.gmra.mxu0 %v271
    %v508 = vpop.f32.mrf.mxu0
    %v509 = vadd.f32 0.0, %v508
    %v510 = vpop.f32.mrf.mxu0
    %v511 = vpop.f32.mrf.mxu0
    %v512 = vadd.f32 0.0, %v511
    %v513 = vpop.f32.mrf.mxu0
    %514 = vdwg.mxu0
    %515 = vmatprep.subr.bf16.mxu0 0
    %516 = vmatpush1.bf16.msra.mxu0 %v441
    %517 = vmatprep.subr.bf16.mxu0 0
    %518 = vmatpush1.bf16.msra.mxu0 %v440
    %519 = vmatprep.subr.bf16.mxu0 0
    %520 = vmatpush1.bf16.msra.mxu0 %v439
    %521 = vmatprep.subr.bf16.mxu0 0
    %522 = vmatpush1.bf16.msra.mxu0 %v438
    %523 = vmatprep.subr.bf16.mxu0 0
    %524 = vmatpush1.bf16.msra.mxu0 %v437
    %525 = vmatprep.subr.bf16.mxu0 0
    %526 = vmatpush1.bf16.msra.mxu0 %v436
    %527 = vmatprep.subr.bf16.mxu0 0
    %528 = vmatpush1.bf16.msra.mxu0 %v435
    %529 = vmatprep.subr.bf16.mxu0 0
    %530 = vmatpush1.bf16.msra.mxu0 %v434
    %531 = vmatprep.subr.bf16.mxu0 0
    %532 = vmatpush2.bf16.msra.mxu0 0
    %533 = vmatprep.subr.bf16.mxu0 0
    %534 = vmatpush2.bf16.msra.mxu0 0
    %535 = vmatprep.subr.bf16.mxu0 0
    %536 = vmatpush2.bf16.msra.mxu0 0
    %537 = vmatprep.subr.bf16.mxu0 0
    %538 = vmatpush2.bf16.msra.mxu0 0
    %539 = vmatprep.subr.bf16.mxu0 0
    %540 = vmatpush2.bf16.msra.mxu0 0
    %541 = vmatprep.subr.bf16.mxu0 0
    %542 = vmatpush2.bf16.msra.mxu0 0
    %543 = vmatprep.subr.bf16.mxu0 0
    %544 = vmatpush2.bf16.msra.mxu0 0
    %545 = vmatprep.subr.bf16.mxu0 0
    %546 = vmatpush2.bf16.msra.mxu0 0
    %547 = vmatprep.mubr.bf16.mxu0 0
    %548 = vmatmul.mubr.bf16.gmra.mxu0 %v270
    %v549 = vpop.f32.mrf.mxu0
    %v550 = vadd.f32 %v501, %v549
    %v551 = vpop.f32.mrf.mxu0
    %v552 = vpop.f32.mrf.mxu0
    %v553 = vadd.f32 %v504, %v552
    %v554 = vpop.f32.mrf.mxu0
    %555 = vmatprep.mubr.bf16.mxu0 0
    %556 = vmatmul.mubr.bf16.gmra.mxu0 %v273
    %v557 = vpop.f32.mrf.mxu0
    %v558 = vadd.f32 %v509, %v557
    %v559 = vpop.f32.mrf.mxu0
    %v560 = vpop.f32.mrf.mxu0
    %v561 = vadd.f32 %v512, %v560
    %v562 = vpop.f32.mrf.mxu0
    %563 = vdwg.mxu0
    %v564 = vlaneseq
    %v565 = vshrl.u32 %v564, 7
    %v566 = vsub.s32 0, %v565
    %v567 = vrot.slane %v86, %v566
    %v568 = vmul.f32 %v550, %v567
    %v569 = vmul.f32 %v553, %v567
    %v570 = vmul.f32 %v558, %v567
    %v571 = vmul.f32 %v561, %v567
    %v572 = vlaneseq
    %v573 = vshrl.u32 %v572, 7
    %v574 = vsub.s32 0, %v573
    %v575 = vrot.slane %v87, %v574
    %v576 = vadd.f32 %v568, %v575
    %v577 = vadd.f32 %v569, %v575
    %v578 = vadd.f32 %v570, %v575
    %v579 = vadd.f32 %v571, %v575
    %v580 = vmax.f32 %v576, 0.0
    %v581 = vmax.f32 %v577, 0.0
    %v582 = vmax.f32 %v578, 0.0
    %v583 = vmax.f32 %v579, 0.0
    %v584 = vrot.slane %v580, 7
    %v585 = vrot.slane %v581, 7
    %v586 = vrot.slane %v582, 7
    %v587 = vrot.slane %v583, 7
    %v588 = vsel %vm246, %v586, %v587
    %v589 = vsel %vm246, %v585, %v586
    %v590 = vsel %vm246, %v584, %v585
    %v591 = vsel %vm246, %v587, %v584
    %v592 = vsel %vm99, 0.0, %v591
    %v593 = vsel %vm100, 0.0, %v590
    %v594 = vsel %vm101, 0.0, %v589
    %v595 = vsel %vm102, 0.0, %v588
    %v596 = vrot.slane %v580, 1
    %v597 = vrot.slane %v581, 1
    %v598 = vrot.slane %v582, 1
    %v599 = vrot.slane %v583, 1
    %v600 = vsel %vm259, %v598, %v599
    %v601 = vsel %vm259, %v597, %v598
    %v602 = vsel %vm259, %v596, %v597
    %v603 = vsel %vm259, %v599, %v596
    %v604 = vsel %vm103, 0.0, %v602
    %v605 = vsel %vm104, 0.0, %v601
    %v606 = vsel %vm105, 0.0, %v600
    %v607 = vsel %vm106, 0.0, %v603
    %v608 = vpack.c.bf16 %v593, %v592
    %v609 = vpack.c.bf16 %v581, %v580
    %v610 = vpack.c.bf16 %v605, %v604
    %v611 = vpack.c.bf16 %v595, %v594
    %v612 = vpack.c.bf16 %v583, %v582
    %v613 = vpack.c.bf16 %v607, %v606
    %v614 = vld [vmem:[#allocation8] sm:$0xf]
    %v615 = vld [vmem:[#allocation8 + $0x4] sm:$0xf]
    %v616 = vld [vmem:[#allocation8 + $0x8] sm:$0xf]
    %v617 = vld [vmem:[#allocation8 + $0xc] sm:$0xf]
    %v618 = vld [vmem:[#allocation8 + $0x10] sm:$0xf]
    %v619 = vld [vmem:[#allocation8 + $0x14] sm:$0xf]
    %v620 = vld [vmem:[#allocation8 + $0x18] sm:$0xf]
    %v621 = vld [vmem:[#allocation8 + $0x1c] sm:$0xf]
    %v622 = vld [vmem:[#allocation8 + $0x20] sm:$0xf]
    %v623 = vld [vmem:[#allocation8 + $0x24] sm:$0xf]
    %v624 = vld [vmem:[#allocation8 + $0x28] sm:$0xf]
    %v625 = vld [vmem:[#allocation8 + $0x2c] sm:$0xf]
    %v626 = vld [vmem:[#allocation8 + $0x30] sm:$0xf]
    %v627 = vld [vmem:[#allocation8 + $0x34] sm:$0xf]
    %v628 = vld [vmem:[#allocation8 + $0x38] sm:$0xf]
    %v629 = vld [vmem:[#allocation8 + $0x3c] sm:$0xf]
    %v630 = vld [vmem:[#allocation8 + $0x40] sm:$0xf]
    %v631 = vld [vmem:[#allocation8 + $0x44] sm:$0xf]
    %v632 = vld [vmem:[#allocation8 + $0x48] sm:$0xf]
    %v633 = vld [vmem:[#allocation8 + $0x4c] sm:$0xf]
    %v634 = vld [vmem:[#allocation8 + $0x50] sm:$0xf]
    %v635 = vld [vmem:[#allocation8 + $0x54] sm:$0xf]
    %v636 = vld [vmem:[#allocation8 + $0x58] sm:$0xf]
    %v637 = vld [vmem:[#allocation8 + $0x5c] sm:$0xf]
    %v638 = vld [vmem:[#allocation8 + $0x60] sm:$0xf]
    %v639 = vld [vmem:[#allocation8 + $0x64] sm:$0xf]
    %v640 = vld [vmem:[#allocation8 + $0x68] sm:$0xf]
    %v641 = vld [vmem:[#allocation8 + $0x6c] sm:$0xf]
    %v642 = vld [vmem:[#allocation8 + $0x70] sm:$0xf]
    %v643 = vld [vmem:[#allocation8 + $0x74] sm:$0xf]
    %v644 = vld [vmem:[#allocation8 + $0x78] sm:$0xf]
    %v645 = vld [vmem:[#allocation8 + $0x7c] sm:$0xf]
    %v646 = vld [vmem:[#allocation8 + $0x80] sm:$0xf]
    %v647 = vld [vmem:[#allocation8 + $0x84] sm:$0xf]
    %v648 = vld [vmem:[#allocation8 + $0x88] sm:$0xf]
    %v649 = vld [vmem:[#allocation8 + $0x8c] sm:$0xf]
    %v650 = vld [vmem:[#allocation8 + $0x90] sm:$0xf]
    %v651 = vld [vmem:[#allocation8 + $0x94] sm:$0xf]
    %v652 = vld [vmem:[#allocation8 + $0x98] sm:$0xf]
    %v653 = vld [vmem:[#allocation8 + $0x9c] sm:$0xf]
    %v654 = vld [vmem:[#allocation8 + $0xa0] sm:$0xf]
    %v655 = vld [vmem:[#allocation8 + $0xa4] sm:$0xf]
    %v656 = vld [vmem:[#allocation8 + $0xa8] sm:$0xf]
    %v657 = vld [vmem:[#allocation8 + $0xac] sm:$0xf]
    %v658 = vld [vmem:[#allocation8 + $0xb0] sm:$0xf]
    %v659 = vld [vmem:[#allocation8 + $0xb4] sm:$0xf]
    %v660 = vld [vmem:[#allocation8 + $0xb8] sm:$0xf]
    %v661 = vld [vmem:[#allocation8 + $0xbc] sm:$0xf]
    %v710 = vunpack.c.l.b16 %v614
    %v711 = vunpack.c.l.b16 %v615
    %v712 = vunpack.c.l.b16 %v616
    %v713 = vunpack.c.l.b16 %v617
    %v714 = vunpack.c.l.b16 %v618
    %v715 = vunpack.c.l.b16 %v619
    %v716 = vunpack.c.l.b16 %v620
    %v717 = vunpack.c.l.b16 %v621
    %v718 = vunpack.c.l.b16 %v622
    %v719 = vunpack.c.l.b16 %v623
    %v720 = vunpack.c.l.b16 %v624
    %v721 = vunpack.c.l.b16 %v625
    %v722 = vunpack.c.l.b16 %v626
    %v723 = vunpack.c.l.b16 %v627
    %v724 = vunpack.c.l.b16 %v628
    %v725 = vunpack.c.l.b16 %v629
    %v726 = vunpack.c.l.b16 %v630
    %v727 = vunpack.c.l.b16 %v631
    %v728 = vunpack.c.l.b16 %v632
    %v729 = vunpack.c.l.b16 %v633
    %v730 = vunpack.c.l.b16 %v634
    %v731 = vunpack.c.l.b16 %v635
    %v732 = vunpack.c.l.b16 %v636
    %v733 = vunpack.c.l.b16 %v637
    %v734 = vunpack.c.l.b16 %v638
    %v735 = vunpack.c.l.b16 %v639
    %v736 = vunpack.c.l.b16 %v640
    %v737 = vunpack.c.l.b16 %v641
    %v738 = vunpack.c.l.b16 %v642
    %v739 = vunpack.c.l.b16 %v643
    %v740 = vunpack.c.l.b16 %v644
    %v741 = vunpack.c.l.b16 %v645
    %v742 = vunpack.c.l.b16 %v646
    %v743 = vunpack.c.l.b16 %v647
    %v744 = vunpack.c.l.b16 %v648
    %v745 = vunpack.c.l.b16 %v649
    %v746 = vunpack.c.l.b16 %v650
    %v747 = vunpack.c.l.b16 %v651
    %v748 = vunpack.c.l.b16 %v652
    %v749 = vunpack.c.l.b16 %v653
    %v750 = vunpack.c.l.b16 %v654
    %v751 = vunpack.c.l.b16 %v655
    %v752 = vunpack.c.l.b16 %v656
    %v753 = vunpack.c.l.b16 %v657
    %v754 = vunpack.c.l.b16 %v658
    %v755 = vunpack.c.l.b16 %v659
    %v756 = vunpack.c.l.b16 %v660
    %v757 = vunpack.c.l.b16 %v661
    %v758 = vpack.c.b16 %v711, %v710
    %v759 = vpack.c.b16 %v713, %v712
    %v760 = vpack.c.b16 %v715, %v714
    %v761 = vpack.c.b16 %v717, %v716
    %v762 = vpack.c.b16 %v719, %v718
    %v763 = vpack.c.b16 %v721, %v720
    %v764 = vpack.c.b16 %v723, %v722
    %v765 = vpack.c.b16 %v725, %v724
    %v766 = vpack.c.b16 %v727, %v726
    %v767 = vpack.c.b16 %v729, %v728
    %v768 = vpack.c.b16 %v731, %v730
    %v769 = vpack.c.b16 %v733, %v732
    %v770 = vpack.c.b16 %v735, %v734
    %v771 = vpack.c.b16 %v737, %v736
    %v772 = vpack.c.b16 %v739, %v738
    %v773 = vpack.c.b16 %v741, %v740
    %v774 = vpack.c.b16 %v743, %v742
    %v775 = vpack.c.b16 %v745, %v744
    %v776 = vpack.c.b16 %v747, %v746
    %v777 = vpack.c.b16 %v749, %v748
    %v778 = vpack.c.b16 %v751, %v750
    %v779 = vpack.c.b16 %v753, %v752
    %v780 = vpack.c.b16 %v755, %v754
    %v781 = vpack.c.b16 %v757, %v756
    %806 = vmatprep.subr.bf16.mxu0 0
    %807 = vmatpush1.bf16.msra.mxu0 %v765
    %808 = vmatprep.subr.bf16.mxu0 0
    %809 = vmatpush1.bf16.msra.mxu0 %v764
    %810 = vmatprep.subr.bf16.mxu0 0
    %811 = vmatpush1.bf16.msra.mxu0 %v763
    %812 = vmatprep.subr.bf16.mxu0 0
    %813 = vmatpush1.bf16.msra.mxu0 %v762
    %814 = vmatprep.subr.bf16.mxu0 0
    %815 = vmatpush1.bf16.msra.mxu0 %v761
    %816 = vmatprep.subr.bf16.mxu0 0
    %817 = vmatpush1.bf16.msra.mxu0 %v760
    %818 = vmatprep.subr.bf16.mxu0 0
    %819 = vmatpush1.bf16.msra.mxu0 %v759
    %820 = vmatprep.subr.bf16.mxu0 0
    %821 = vmatpush1.bf16.msra.mxu0 %v758
    %822 = vmatprep.subr.bf16.mxu0 0
    %823 = vmatpush2.bf16.msra.mxu0 %v773
    %824 = vmatprep.subr.bf16.mxu0 0
    %825 = vmatpush2.bf16.msra.mxu0 %v772
    %826 = vmatprep.subr.bf16.mxu0 0
    %827 = vmatpush2.bf16.msra.mxu0 %v771
    %828 = vmatprep.subr.bf16.mxu0 0
    %829 = vmatpush2.bf16.msra.mxu0 %v770
    %830 = vmatprep.subr.bf16.mxu0 0
    %831 = vmatpush2.bf16.msra.mxu0 %v769
    %832 = vmatprep.subr.bf16.mxu0 0
    %833 = vmatpush2.bf16.msra.mxu0 %v768
    %834 = vmatprep.subr.bf16.mxu0 0
    %835 = vmatpush2.bf16.msra.mxu0 %v767
    %836 = vmatprep.subr.bf16.mxu0 0
    %837 = vmatpush2.bf16.msra.mxu0 %v766
    %838 = vmatprep.mubr.bf16.mxu0 %v609
    %839 = vmatmul.mubr.bf16.gmra.mxu0 %v608
    %v840 = vpop.f32.mrf.mxu0
    %v841 = vadd.f32 0.0, %v840
    %v842 = vpop.f32.mrf.mxu0
    %v843 = vpop.f32.mrf.mxu0
    %v844 = vadd.f32 0.0, %v843
    %v845 = vpop.f32.mrf.mxu0
    %846 = vmatprep.mubr.bf16.mxu0 %v612
    %847 = vmatmul.mubr.bf16.gmra.mxu0 %v611
    %v848 = vpop.f32.mrf.mxu0
    %v849 = vadd.f32 0.0, %v848
    %v850 = vpop.f32.mrf.mxu0
    %v851 = vpop.f32.mrf.mxu0
    %v852 = vadd.f32 0.0, %v851
    %v853 = vpop.f32.mrf.mxu0
    %854 = vdwg.mxu0
    %855 = vmatprep.subr.bf16.mxu0 0
    %856 = vmatpush1.bf16.msra.mxu0 %v781
    %857 = vmatprep.subr.bf16.mxu0 0
    %858 = vmatpush1.bf16.msra.mxu0 %v780
    %859 = vmatprep.subr.bf16.mxu0 0
    %860 = vmatpush1.bf16.msra.mxu0 %v779
    %861 = vmatprep.subr.bf16.mxu0 0
    %862 = vmatpush1.bf16.msra.mxu0 %v778
    %863 = vmatprep.subr.bf16.mxu0 0
    %864 = vmatpush1.bf16.msra.mxu0 %v777
    %865 = vmatprep.subr.bf16.mxu0 0
    %866 = vmatpush1.bf16.msra.mxu0 %v776
    %867 = vmatprep.subr.bf16.mxu0 0
    %868 = vmatpush1.bf16.msra.mxu0 %v775
    %869 = vmatprep.subr.bf16.mxu0 0
    %870 = vmatpush1.bf16.msra.mxu0 %v774
    %871 = vmatprep.subr.bf16.mxu0 0
    %872 = vmatpush2.bf16.msra.mxu0 0
    %873 = vmatprep.subr.bf16.mxu0 0
    %874 = vmatpush2.bf16.msra.mxu0 0
    %875 = vmatprep.subr.bf16.mxu0 0
    %876 = vmatpush2.bf16.msra.mxu0 0
    %877 = vmatprep.subr.bf16.mxu0 0
    %878 = vmatpush2.bf16.msra.mxu0 0
    %879 = vmatprep.subr.bf16.mxu0 0
    %880 = vmatpush2.bf16.msra.mxu0 0
    %881 = vmatprep.subr.bf16.mxu0 0
    %882 = vmatpush2.bf16.msra.mxu0 0
    %883 = vmatprep.subr.bf16.mxu0 0
    %884 = vmatpush2.bf16.msra.mxu0 0
    %885 = vmatprep.subr.bf16.mxu0 0
    %886 = vmatpush2.bf16.msra.mxu0 0
    %887 = vmatprep.mubr.bf16.mxu0 0
    %888 = vmatmul.mubr.bf16.gmra.mxu0 %v610
    %v889 = vpop.f32.mrf.mxu0
    %v890 = vadd.f32 %v841, %v889
    %v891 = vpop.f32.mrf.mxu0
    %v892 = vpop.f32.mrf.mxu0
    %v893 = vadd.f32 %v844, %v892
    %v894 = vpop.f32.mrf.mxu0
    %895 = vmatprep.mubr.bf16.mxu0 0
    %896 = vmatmul.mubr.bf16.gmra.mxu0 %v613
    %v897 = vpop.f32.mrf.mxu0
    %v898 = vadd.f32 %v849, %v897
    %v899 = vpop.f32.mrf.mxu0
    %v900 = vpop.f32.mrf.mxu0
    %v901 = vadd.f32 %v852, %v900
    %v902 = vpop.f32.mrf.mxu0
    %903 = vdwg.mxu0
    %v904 = vlaneseq
    %v905 = vshrl.u32 %v904, 7
    %v906 = vsub.s32 0, %v905
    %v907 = vrot.slane %v88, %v906
    %v908 = vmul.f32 %v890, %v907
    %v909 = vmul.f32 %v893, %v907
    %v910 = vmul.f32 %v898, %v907
    %v911 = vmul.f32 %v901, %v907
    %v912 = vlaneseq
    %v913 = vshrl.u32 %v912, 7
    %v914 = vsub.s32 0, %v913
    %v915 = vrot.slane %v89, %v914
    %v916 = vadd.f32 %v908, %v915
    %v917 = vadd.f32 %v909, %v915
    %v918 = vadd.f32 %v910, %v915
    %v919 = vadd.f32 %v911, %v915
    %v920 = vadd.f32 %v916, %v80
    %v921 = vadd.f32 %v917, %v81
    %v922 = vadd.f32 %v918, %v82
    %v923 = vadd.f32 %v919, %v83
    %v924 = vmax.f32 %v920, 0.0
    %v925 = vmax.f32 %v921, 0.0
    %v926 = vmax.f32 %v922, 0.0
    %v927 = vmax.f32 %v923, 0.0
    %928 = vst [vmem:[#allocation10] sm:$0xff] %v924
    %929 = vst [vmem:[#allocation10 + $0x8] sm:$0xff] %v925
    %930 = vst [vmem:[#allocation10 + $0x10] sm:$0xff] %v926
    %931 = vst [vmem:[#allocation10 + $0x18] sm:$0xff] %v927
    // Predicated region
    $region42: #{tpu_custom_call.1} parent=1 // pred_check
      _
    $region43: #{tpu_custom_call.1} parent=1 // pred_check_branch
      %933 = sbr.rel (0) target = $region45
    $region44: #{tpu_custom_call.1} parent=1 // pred_region
      %s935 = ssub.s32 512, 512
      %936 = vsyncadd [#allocation4], %s935
      %s937 = sshll.u32 [#allocation10], 4
      %s938 = int_to_ptr.vmem [resolvable:$true] %s937
      %943 = dma.vmem_to_hbm [thread:$0]  %s938, 512, %s6, [#allocation4], 128, 128, 8
    $region45: #{tpu_custom_call.1} parent=1 // pred_fallthru
      _
    // Predicated region
    $region46: #{tpu_custom_call.1} parent=1 // pred_check
      _
    $region47: #{tpu_custom_call.1} parent=1 // pred_check_branch
      %945 = sbr.rel (0) target = $region49
    $region48: #{tpu_custom_call.1} parent=1 // pred_region
      %946 = dma.done [#allocation4], 512
    $region49: #{tpu_custom_call.1} parent=1 // pred_fallthru
      _
    %947 = vsyncpa [#allocation3], 1
    %948 = vsyncpa [#allocation6], 1
    %949 = vsyncpa [#allocation9], 1
    %950 = vsyncpa [#allocation4], 1

</llo_original>
